<compile_context>
chip_gen: v7x
topology: tpu7x:2x2x1
jax: 0.10.0
libtpu: 0.0.40
codegen_flags: <defaults>
</compile_context>

<pallas_src>
import functools

import jax
import jax.numpy as jnp
from jax.experimental import pallas as pl
from jax.experimental.pallas import tpu as pltpu


def _round_up(x, m):
    return ((x + m - 1) // m) * m


def _default_compute_dtype():
    # v5e MXU is bf16-native; f32 matmuls there would co-saturate with DMA.
    try:
        kind = jax.devices()[0].device_kind.lower()
    except Exception:
        return jnp.float32
    if ("v5 lite" in kind) or ("v5e" in kind) or ("v5lite" in kind):
        return jnp.bfloat16
    return jnp.float32


# ---------------------------------------------------------------------------
# Pallas kernel: clip -> [Linear+ReLU]*L -> Linear on one (TB, input_size) tile.
# Weights (in_i, out_i) and biases (1, out_i) are VMEM-resident across the grid.
# ---------------------------------------------------------------------------
def _mlp_kernel(x_ref, *refs, input_size, ac_size, compute_dtype):
    out_ref = refs[-1]
    wb = refs[:-1]
    n_linear = len(wb) // 2
    w_refs = wb[:n_linear]           # each (in_i, out_i), compute_dtype
    b_refs = wb[n_linear:]           # each (1, out_i), f32

    x = x_ref[...]                   # (TB, input_size) f32

    # Clip trailing `ac_size` features to [-1, 1] (torch.split + clip + cat).
    # Whole-vreg VPU select; cheap relative to the DMA streams.
    col = jax.lax.broadcasted_iota(jnp.int32, x.shape, dimension=1)
    x = jnp.where(col >= (input_size - ac_size), jnp.clip(x, -1.0, 1.0), x)

    h = x
    for i in range(n_linear):
        w = w_refs[i][...]                                   # already compute_dtype
        acc = jnp.dot(h.astype(compute_dtype), w,
                      preferred_element_type=jnp.float32)    # f32 MXU accumulate
        h = acc + b_refs[i][...]                             # f32 bias add (broadcast)
        if i < n_linear - 1:                                 # ReLU on hidden layers only
            h = jnp.maximum(h, 0.0)

    out_ref[...] = h.astype(out_ref.dtype)


# ---------------------------------------------------------------------------
# Parameter init: xavier_normal_ with gain = calculate_gain('relu') = sqrt(2),
# biases zero.  Weights kept in (in, out) layout (xavier std is symmetric in
# fan_in/fan_out, so this matches torch's distribution exactly).
# ---------------------------------------------------------------------------
def init_params(key, input_size, output_size, num_fc_layers, depth_fc_layers):
    gain = jnp.sqrt(2.0)
    dims = [input_size] + [depth_fc_layers] * num_fc_layers + [output_size]
    params = []
    for i in range(len(dims) - 1):
        fan_in, fan_out = dims[i], dims[i + 1]
        key, sub = jax.random.split(key)
        std = gain * jnp.sqrt(2.0 / (fan_in + fan_out))
        w = std * jax.random.normal(sub, (fan_in, fan_out), dtype=jnp.float32)
        b = jnp.zeros((1, fan_out), dtype=jnp.float32)
        params.append(w)
        params.append(b)
    return params


# ---------------------------------------------------------------------------
# Wrapper: batch-tiled pallas_call over the UNPADDED arrays.  Activations are
# streamed at natural widths; weights/biases are resident; no wrapper pad/slice.
# ---------------------------------------------------------------------------
def feedforward_network(inputs, params, *, input_size, ac_size, output_size,
                        block_batch=2048, compute_dtype=None):
    if compute_dtype is None:
        compute_dtype = _default_compute_dtype()

    B = inputs.shape[0]
    x2d = inputs.reshape(B, input_size)
    if x2d.dtype != jnp.float32:
        x2d = x2d.astype(jnp.float32)

    weights = [w.astype(compute_dtype) for w in params[0::2]]
    biases = [b.reshape(1, -1).astype(jnp.float32) for b in params[1::2]]
    n_linear = len(weights)
    assert weights[0].shape[0] == input_size
    assert weights[-1].shape[1] == output_size

    # Batch tile: multiple of 8 (sublane), capped by block_batch, and chosen so
    # the grid has >= 2 steps whenever B permits (v7x has 2 TensorCores).
    half = _round_up(pl.cdiv(B, 2), 8)
    TB = max(8, min(_round_up(block_batch, 8), half))
    grid = (pl.cdiv(B, TB),)

    # Right-size the VMEM request (double-buffered streams + resident params +
    # per-layer intermediates), with 2x headroom; never ask for v7x's full 64 MiB.
    max_width = max([input_size, output_size] + [w.shape[1] for w in weights])
    stream_bytes = 2 * TB * (input_size + output_size) * 4
    param_bytes = 2 * (sum(w.size * w.dtype.itemsize for w in weights)
                       + sum(b.size * 4 for b in biases))
    work_bytes = 4 * TB * max_width * 4
    vmem_limit = int(max(4 << 20, min(32 << 20,
                                      2 * (stream_bytes + param_bytes + work_bytes))))

    kernel = functools.partial(
        _mlp_kernel,
        input_size=input_size,
        ac_size=ac_size,
        compute_dtype=compute_dtype,
    )

    # Streamed activations at natural width (block last dim == full array dim,
    # so the (8,128) rule is satisfied without lane padding).
    in_specs = [pl.BlockSpec((TB, input_size), lambda i: (i, 0))]
    for w in weights:
        in_specs.append(pl.BlockSpec(w.shape, lambda i: (0, 0)))   # resident weights
    for b in biases:
        in_specs.append(pl.BlockSpec(b.shape, lambda i: (0, 0)))   # resident biases

    out = pl.pallas_call(
        kernel,
        out_shape=jax.ShapeDtypeStruct((B, output_size), jnp.float32),
        grid=grid,
        in_specs=in_specs,
        out_specs=pl.BlockSpec((TB, output_size), lambda i: (i, 0)),
        compiler_params=pltpu.CompilerParams(
            dimension_semantics=("parallel",),
            vmem_limit_bytes=vmem_limit,
        ),
    )(x2d, *weights, *biases)

    return out


# Pure-JAX reference for sanity checking (matches the PyTorch module).
def _reference(inputs, params, *, input_size, ac_size):
    B = inputs.shape[0]
    x = inputs.reshape(B, input_size)
    first = x[:, : input_size - ac_size]
    second = jnp.clip(x[:, input_size - ac_size:], -1.0, 1.0)
    h = jnp.concatenate([first, second], axis=1)
    n_linear = len(params) // 2
    for i in range(n_linear):
        h = h @ params[2 * i] + params[2 * i + 1]
        if i < n_linear - 1:
            h = jnp.maximum(h, 0.0)
    return h


if __name__ == "__main__":
    # Small, module-consistent shapes.
    INPUT_SIZE = 32      # state+action feature dim
    AC_SIZE = 8          # trailing action features (clipped to [-1, 1])
    OUTPUT_SIZE = 24
    NUM_FC_LAYERS = 2
    DEPTH_FC_LAYERS = 64
    BATCH = 20           # not a multiple of 8 -> exercises the ragged final tile

    key = jax.random.PRNGKey(0)
    k_in, k_par, k_in2 = jax.random.split(key, 3)

    # inputs deliberately exceed [-1, 1] so the clip matters.
    x = 3.0 * jax.random.normal(k_in, (BATCH, 1, INPUT_SIZE), dtype=jnp.float32)
    params = init_params(k_par, INPUT_SIZE, OUTPUT_SIZE, NUM_FC_LAYERS,
                         DEPTH_FC_LAYERS)

    ref = _reference(x, params, input_size=INPUT_SIZE, ac_size=AC_SIZE)

    # f32 path (exact): tight tolerance.  Grid has 2 steps (TB=16), last ragged.
    out_f32 = feedforward_network(
        x, params,
        input_size=INPUT_SIZE, ac_size=AC_SIZE, output_size=OUTPUT_SIZE,
        compute_dtype=jnp.float32,
    )
    out_f32 = jax.block_until_ready(out_f32)
    assert out_f32.shape == (BATCH, OUTPUT_SIZE), out_f32.shape
    assert jnp.allclose(out_f32, ref, atol=1e-4, rtol=1e-4), "f32 mismatch vs reference"

    # Second f32 check at a different ragged batch size (multi-step grid path).
    B2 = 53
    x2 = 3.0 * jax.random.normal(k_in2, (B2, 1, INPUT_SIZE), dtype=jnp.float32)
    ref2 = _reference(x2, params, input_size=INPUT_SIZE, ac_size=AC_SIZE)
    out2 = feedforward_network(
        x2, params,
        input_size=INPUT_SIZE, ac_size=AC_SIZE, output_size=OUTPUT_SIZE,
        compute_dtype=jnp.float32,
    )
    out2 = jax.block_until_ready(out2)
    assert out2.shape == (B2, OUTPUT_SIZE), out2.shape
    assert jnp.allclose(out2, ref2, atol=1e-4, rtol=1e-4), "f32 (ragged B) mismatch"

    # bf16 MXU operands (v5e/v6e fast path), f32 accumulate: loose tolerance.
    # (bf16 error compounds per layer since h is re-cast before each matmul.)
    out_bf16 = feedforward_network(
        x, params,
        input_size=INPUT_SIZE, ac_size=AC_SIZE, output_size=OUTPUT_SIZE,
        compute_dtype=jnp.bfloat16,
    )
    out_bf16 = jax.block_until_ready(out_bf16)
    assert out_bf16.shape == (BATCH, OUTPUT_SIZE), out_bf16.shape
    assert jnp.allclose(out_bf16, ref, atol=1e-1, rtol=1e-1), "bf16 mismatch vs reference"

    print("KERNEL_OK")
</pallas_src>

<mosaic_0001>
module attributes {stable_mosaic.version = 11 : i64} {
  func.func @_mlp_kernel(%arg0: i32, %arg1: memref<16x32xf32, #tpu.memory_space<vmem>>, %arg2: memref<32x64xf32, #tpu.memory_space<vmem>>, %arg3: memref<64x64xf32, #tpu.memory_space<vmem>>, %arg4: memref<64x24xf32, #tpu.memory_space<vmem>>, %arg5: memref<1x64xf32, #tpu.memory_space<vmem>>, %arg6: memref<1x64xf32, #tpu.memory_space<vmem>>, %arg7: memref<1x24xf32, #tpu.memory_space<vmem>>, %arg8: memref<16x24xf32, #tpu.memory_space<vmem>>) attributes {dimension_semantics = [#tpu.dimension_semantics<parallel>], iteration_bounds = array<i64: 2>, scalar_prefetch = 0 : i64, scratch_operands = 0 : i64, tpu.core_type = #tpu.core_type<tc>, window_params = [{transform_indices = @transform_0, window_bounds = array<i64: 16, 32>}, {pipeline_mode = #tpu.pipeline_mode<synchronous>, transform_indices = @transform_1, window_bounds = array<i64: 32, 64>}, {pipeline_mode = #tpu.pipeline_mode<synchronous>, transform_indices = @transform_2, window_bounds = array<i64: 64, 64>}, {pipeline_mode = #tpu.pipeline_mode<synchronous>, transform_indices = @transform_3, window_bounds = array<i64: 64, 24>}, {pipeline_mode = #tpu.pipeline_mode<synchronous>, transform_indices = @transform_4, window_bounds = array<i64: 1, 64>}, {pipeline_mode = #tpu.pipeline_mode<synchronous>, transform_indices = @transform_5, window_bounds = array<i64: 1, 64>}, {pipeline_mode = #tpu.pipeline_mode<synchronous>, transform_indices = @transform_6, window_bounds = array<i64: 1, 24>}, {transform_indices = @transform_7, window_bounds = array<i64: 16, 24>}]} {
    %c0 = arith.constant 0 : index
    %c0_0 = arith.constant 0 : index
    %0 = vector.load %arg1[%c0, %c0_0] : memref<16x32xf32, #tpu.memory_space<vmem>>, vector<16x32xf32>
    %1 = tpu.iota {dimensions = array<i32: 1>} : vector<16x32xi32>
    %c24_i32 = arith.constant 24 : i32
    %2 = vector.broadcast %c24_i32 : i32 to vector<16x32xi32>
    %3 = arith.cmpi sge, %1, %2 : vector<16x32xi32>
    %cst = arith.constant -1.000000e+00 : f32
    %cst_1 = arith.constant 1.000000e+00 : f32
    %4 = vector.broadcast %cst : f32 to vector<16x32xf32>
    %5 = arith.maximumf %4, %0 : vector<16x32xf32>
    %6 = vector.broadcast %cst_1 : f32 to vector<16x32xf32>
    %7 = arith.minimumf %6, %5 : vector<16x32xf32>
    %8 = arith.select %3, %7, %0 : vector<16x32xi1>, vector<16x32xf32>
    %c0_2 = arith.constant 0 : index
    %c0_3 = arith.constant 0 : index
    %9 = vector.load %arg2[%c0_2, %c0_3] : memref<32x64xf32, #tpu.memory_space<vmem>>, vector<32x64xf32>
    %cst_4 = arith.constant dense<0.000000e+00> : vector<16x64xf32>
    %10 = tpu.matmul %8, %9, %cst_4 {dimension_numbers = #tpu.dot_dimension_numbers<[1], [0], [0], [1], [0, 0, 1, 1], [], []>} : vector<16x32xf32>, vector<32x64xf32>, vector<16x64xf32> -> vector<16x64xf32>
    %c0_5 = arith.constant 0 : index
    %c0_6 = arith.constant 0 : index
    %11 = vector.load %arg5[%c0_5, %c0_6] : memref<1x64xf32, #tpu.memory_space<vmem>>, vector<1x64xf32>
    %12 = vector.broadcast %11 : vector<1x64xf32> to vector<16x64xf32>
    %13 = arith.addf %10, %12 : vector<16x64xf32>
    %cst_7 = arith.constant 0.000000e+00 : f32
    %14 = vector.broadcast %cst_7 : f32 to vector<16x64xf32>
    %15 = arith.maximumf %13, %14 : vector<16x64xf32>
    %c0_8 = arith.constant 0 : index
    %c0_9 = arith.constant 0 : index
    %16 = vector.load %arg3[%c0_8, %c0_9] : memref<64x64xf32, #tpu.memory_space<vmem>>, vector<64x64xf32>
    %cst_10 = arith.constant dense<0.000000e+00> : vector<16x64xf32>
    %17 = tpu.matmul %15, %16, %cst_10 {dimension_numbers = #tpu.dot_dimension_numbers<[1], [0], [0], [1], [0, 0, 1, 1], [], []>} : vector<16x64xf32>, vector<64x64xf32>, vector<16x64xf32> -> vector<16x64xf32>
    %c0_11 = arith.constant 0 : index
    %c0_12 = arith.constant 0 : index
    %18 = vector.load %arg6[%c0_11, %c0_12] : memref<1x64xf32, #tpu.memory_space<vmem>>, vector<1x64xf32>
    %19 = vector.broadcast %18 : vector<1x64xf32> to vector<16x64xf32>
    %20 = arith.addf %17, %19 : vector<16x64xf32>
    %cst_13 = arith.constant 0.000000e+00 : f32
    %21 = vector.broadcast %cst_13 : f32 to vector<16x64xf32>
    %22 = arith.maximumf %20, %21 : vector<16x64xf32>
    %c0_14 = arith.constant 0 : index
    %c0_15 = arith.constant 0 : index
    %23 = vector.load %arg4[%c0_14, %c0_15] : memref<64x24xf32, #tpu.memory_space<vmem>>, vector<64x24xf32>
    %cst_16 = arith.constant dense<0.000000e+00> : vector<16x24xf32>
    %24 = tpu.matmul %22, %23, %cst_16 {dimension_numbers = #tpu.dot_dimension_numbers<[1], [0], [0], [1], [0, 0, 1, 1], [], []>} : vector<16x64xf32>, vector<64x24xf32>, vector<16x24xf32> -> vector<16x24xf32>
    %c0_17 = arith.constant 0 : index
    %c0_18 = arith.constant 0 : index
    %25 = vector.load %arg7[%c0_17, %c0_18] : memref<1x24xf32, #tpu.memory_space<vmem>>, vector<1x24xf32>
    %26 = vector.broadcast %25 : vector<1x24xf32> to vector<16x24xf32>
    %27 = arith.addf %24, %26 : vector<16x24xf32>
    %c0_19 = arith.constant 0 : index
    %c0_20 = arith.constant 0 : index
    %28 = vector.load %arg8[%c0_19, %c0_20] : memref<16x24xf32, #tpu.memory_space<vmem>>, vector<16x24xf32>
    tpu.vector_store %arg8[%c0_19, %c0_20], %27 {strides = array<i32>} : memref<16x24xf32, #tpu.memory_space<vmem>>, vector<16x24xf32>,
    return
  }
  func.func @transform_0(%arg0: i32) -> (i32, i32) {
    %c0_i32 = arith.constant 0 : i32
    %c0_i32_0 = arith.constant 0 : i32
    return %arg0, %c0_i32 : i32, i32
  }
  func.func @transform_1(%arg0: i32) -> (i32, i32) {
    %c0_i32 = arith.constant 0 : i32
    %c0_i32_0 = arith.constant 0 : i32
    %c0_i32_1 = arith.constant 0 : i32
    return %c0_i32, %c0_i32_0 : i32, i32
  }
  func.func @transform_2(%arg0: i32) -> (i32, i32) {
    %c0_i32 = arith.constant 0 : i32
    %c0_i32_0 = arith.constant 0 : i32
    %c0_i32_1 = arith.constant 0 : i32
    return %c0_i32, %c0_i32_0 : i32, i32
  }
  func.func @transform_3(%arg0: i32) -> (i32, i32) {
    %c0_i32 = arith.constant 0 : i32
    %c0_i32_0 = arith.constant 0 : i32
    %c0_i32_1 = arith.constant 0 : i32
    return %c0_i32, %c0_i32_0 : i32, i32
  }
  func.func @transform_4(%arg0: i32) -> (i32, i32) {
    %c0_i32 = arith.constant 0 : i32
    %c0_i32_0 = arith.constant 0 : i32
    %c0_i32_1 = arith.constant 0 : i32
    return %c0_i32, %c0_i32_0 : i32, i32
  }
  func.func @transform_5(%arg0: i32) -> (i32, i32) {
    %c0_i32 = arith.constant 0 : i32
    %c0_i32_0 = arith.constant 0 : i32
    %c0_i32_1 = arith.constant 0 : i32
    return %c0_i32, %c0_i32_0 : i32, i32
  }
  func.func @transform_6(%arg0: i32) -> (i32, i32) {
    %c0_i32 = arith.constant 0 : i32
    %c0_i32_0 = arith.constant 0 : i32
    %c0_i32_1 = arith.constant 0 : i32
    return %c0_i32, %c0_i32_0 : i32, i32
  }
  func.func @transform_7(%arg0: i32) -> (i32, i32) {
    %c0_i32 = arith.constant 0 : i32
    %c0_i32_0 = arith.constant 0 : i32
    return %arg0, %c0_i32 : i32, i32
  }
}

</mosaic_0001>

<llo_original>
// kernel: tpu_custom_call.1
$region0: #{tpu_custom_call.1}
  #allocation0 [shape = 'u32[]', space=smem, size = 0x4, offset = 0x4, fixed_abs, tag = 'smem constant byte address 0x4 - core index']
  #allocation1 [shape = 'u32[144,128]{1,0:T(1,128)}', space=vmem, size = 0x12000, scoped, tag = 'internal scratch']
  %s0 = inlined_call_operand.vmem [shape: f32[20,32], index: 0, kind: input, shape index: {}]
  %s1 = inlined_call_operand.hbm [shape: f32[32,64], index: 1, kind: input, shape index: {}]
  %s2 = inlined_call_operand.vmem [shape: f32[64,64], index: 2, kind: input, shape index: {}]
  %s3 = inlined_call_operand.vmem [shape: f32[64,24], index: 3, kind: input, shape index: {}]
  %s4 = inlined_call_operand.vmem [shape: f32[1,64], index: 4, kind: input, shape index: {}]
  %s5 = inlined_call_operand.vmem [shape: f32[1,64], index: 5, kind: input, shape index: {}]
  %s6 = inlined_call_operand.vmem [shape: f32[1,24], index: 6, kind: input, shape index: {}]
  %s7 = inlined_call_operand.hbm [shape: f32[20,24], index: 7, kind: output, shape index: {}]
  %s8 = sld [smem:[#allocation0]]
  $region65: #{tpu_custom_call.1} parent=0
    _
  %s10 = ssub.s32 1, %s8
  %s11 = scalar_select 0, %s10, %s8
  $region1: #{tpu_custom_call.1} parent=0
    #allocation2 [shape = 'u8[16384]{0}', space=vmem, size = 0x4000, scoped, tag = 'input window, operand 1, single buffered']
    #allocation3 [shape = 's32[2]{0}', space=sflag, size = 0x8, scoped, tag = 'scoped memory for tpu_custom_call.1']
    #allocation4 [shape = 's32[2]{0}', space=sflag, size = 0x8, scoped, tag = 'scoped memory for tpu_custom_call.1']
    #allocation5 [shape = 'u8[16384]{0}', space=vmem, size = 0x4000, scoped, tag = 'output window, operand 0']
    %12 = vsyncpa [#allocation3], 0
    %13 = vsyncpa [#allocation4], 0
    %s14 = scalar_lea.sflag [#allocation4], 1
    %15 = vsyncpa %s14, 0
    loop: start=0, step=1, limit=4
    $region2: #{tpu_custom_call.1} parent=1 // loop_pre_header
      _
    $region3: #{tpu_custom_call.1} parent=1 // loop_header
      %s17 = sphi 0, %s21
      %p18 = scmp.ge.s32.totalorder %s17, 4
      %s27 = sphi 0, %s29
      %s30 = sphi 0, %s27
      %s31 = sphi 0, %s30
      %s47 = sphi 0, %s31
      %s51 = sphi 0, %s51
      %s53 = sphi 0, %s51
      %s54 = sphi 0, %s53
      %s68 = sphi 0, %s54
      %s72 = sphi 0, %s72
      %s74 = sphi 0, %s72
      %s75 = sphi 0, %s74
      %s89 = sphi 0, %s75
      %s93 = sphi 0, %s93
      %s95 = sphi 0, %s93
      %s96 = sphi 0, %s95
      %s110 = sphi 0, %s96
      %s114 = sphi 0, %s114
      %s116 = sphi 0, %s114
      %s117 = sphi 0, %s116
      %s131 = sphi 0, %s117
      %s135 = sphi 0, %s135
      %s137 = sphi 0, %s135
      %s138 = sphi 0, %s137
      %s152 = sphi 0, %s138
      %s156 = sphi 0, %s156
      %s158 = sphi 0, %s156
      %s159 = sphi 0, %s158
      %s173 = sphi 0, %s159
      %s179 = sphi 0, %s181
      %s182 = sphi 0, %s179
      %s183 = sphi 0, %s182
      %s199 = sphi 0, %s183
    $region4: #{tpu_custom_call.1} parent=1 // loop_header_branch
      %20 = sbr.rel (%p18) target = $region8
    $region5: #{tpu_custom_call.1} parent=1 // loop_body
      %s22 = ssub.s32 %s17, 1
      %s23 = ssub.s32 %s17, 2
      %s24 = sadd.s32 %s17, 1
      %s25 = ssub.s32 %s17, %s24
      %p26 = scmp.eq.s32.totalorder %s25, 0
      %s28 = sadd.s32 %s27, 1
      %s29 = scalar_select %p26, %s27, %s28
      %p32 = pneg %p26
      %p33 = scmp.eq.s32.totalorder %s17, 1
      %p34 = por %p32, %p33
      %p35 = scmp.ne.s32.totalorder %s27, %s30
      %p36 = scmp.eq.s32.totalorder %s17, 0
      %p37 = por %p35, %p36
      %p38 = scmp.ne.s32.totalorder %s27, %s30
      %p39 = scmp.eq.s32.totalorder %s22, 1
      %p40 = por %p38, %p39
      %p41 = scmp.ne.s32.totalorder %s30, %s31
      %p42 = scmp.eq.s32.totalorder %s22, 0
      %p43 = por %p41, %p42
      %p44 = scmp.ne.s32.totalorder %s30, %s31
      %p45 = scmp.eq.s32.totalorder %s23, 1
      %p46 = por %p44, %p45
      %p48 = scmp.ne.s32.totalorder %s31, %s47
      %p49 = scmp.eq.s32.totalorder %s23, 0
      %p50 = por %p48, %p49
      %s52 = sadd.s32 %s51, 1
      %p55 = scmp.eq.s32.totalorder %s17, 1
      %p56 = scmp.ne.s32.totalorder %s51, %s53
      %p57 = scmp.eq.s32.totalorder %s17, 0
      %p58 = por %p56, %p57
      %p59 = scmp.ne.s32.totalorder %s51, %s53
      %p60 = scmp.eq.s32.totalorder %s22, 1
      %p61 = por %p59, %p60
      %p62 = scmp.ne.s32.totalorder %s53, %s54
      %p63 = scmp.eq.s32.totalorder %s22, 0
      %p64 = por %p62, %p63
      %p65 = scmp.ne.s32.totalorder %s53, %s54
      %p66 = scmp.eq.s32.totalorder %s23, 1
      %p67 = por %p65, %p66
      %p69 = scmp.ne.s32.totalorder %s54, %s68
      %p70 = scmp.eq.s32.totalorder %s23, 0
      %p71 = por %p69, %p70
      %s73 = sadd.s32 %s72, 1
      %p76 = scmp.eq.s32.totalorder %s17, 1
      %p77 = scmp.ne.s32.totalorder %s72, %s74
      %p78 = scmp.eq.s32.totalorder %s17, 0
      %p79 = por %p77, %p78
      %p80 = scmp.ne.s32.totalorder %s72, %s74
      %p81 = scmp.eq.s32.totalorder %s22, 1
      %p82 = por %p80, %p81
      %p83 = scmp.ne.s32.totalorder %s74, %s75
      %p84 = scmp.eq.s32.totalorder %s22, 0
      %p85 = por %p83, %p84
      %p86 = scmp.ne.s32.totalorder %s74, %s75
      %p87 = scmp.eq.s32.totalorder %s23, 1
      %p88 = por %p86, %p87
      %p90 = scmp.ne.s32.totalorder %s75, %s89
      %p91 = scmp.eq.s32.totalorder %s23, 0
      %p92 = por %p90, %p91
      %s94 = sadd.s32 %s93, 1
      %p97 = scmp.eq.s32.totalorder %s17, 1
      %p98 = scmp.ne.s32.totalorder %s93, %s95
      %p99 = scmp.eq.s32.totalorder %s17, 0
      %p100 = por %p98, %p99
      %p101 = scmp.ne.s32.totalorder %s93, %s95
      %p102 = scmp.eq.s32.totalorder %s22, 1
      %p103 = por %p101, %p102
      %p104 = scmp.ne.s32.totalorder %s95, %s96
      %p105 = scmp.eq.s32.totalorder %s22, 0
      %p106 = por %p104, %p105
      %p107 = scmp.ne.s32.totalorder %s95, %s96
      %p108 = scmp.eq.s32.totalorder %s23, 1
      %p109 = por %p107, %p108
      %p111 = scmp.ne.s32.totalorder %s96, %s110
      %p112 = scmp.eq.s32.totalorder %s23, 0
      %p113 = por %p111, %p112
      %s115 = sadd.s32 %s114, 1
      %p118 = scmp.eq.s32.totalorder %s17, 1
      %p119 = scmp.ne.s32.totalorder %s114, %s116
      %p120 = scmp.eq.s32.totalorder %s17, 0
      %p121 = por %p119, %p120
      %p122 = scmp.ne.s32.totalorder %s114, %s116
      %p123 = scmp.eq.s32.totalorder %s22, 1
      %p124 = por %p122, %p123
      %p125 = scmp.ne.s32.totalorder %s116, %s117
      %p126 = scmp.eq.s32.totalorder %s22, 0
      %p127 = por %p125, %p126
      %p128 = scmp.ne.s32.totalorder %s116, %s117
      %p129 = scmp.eq.s32.totalorder %s23, 1
      %p130 = por %p128, %p129
      %p132 = scmp.ne.s32.totalorder %s117, %s131
      %p133 = scmp.eq.s32.totalorder %s23, 0
      %p134 = por %p132, %p133
      %s136 = sadd.s32 %s135, 1
      %p139 = scmp.eq.s32.totalorder %s17, 1
      %p140 = scmp.ne.s32.totalorder %s135, %s137
      %p141 = scmp.eq.s32.totalorder %s17, 0
      %p142 = por %p140, %p141
      %p143 = scmp.ne.s32.totalorder %s135, %s137
      %p144 = scmp.eq.s32.totalorder %s22, 1
      %p145 = por %p143, %p144
      %p146 = scmp.ne.s32.totalorder %s137, %s138
      %p147 = scmp.eq.s32.totalorder %s22, 0
      %p148 = por %p146, %p147
      %p149 = scmp.ne.s32.totalorder %s137, %s138
      %p150 = scmp.eq.s32.totalorder %s23, 1
      %p151 = por %p149, %p150
      %p153 = scmp.ne.s32.totalorder %s138, %s152
      %p154 = scmp.eq.s32.totalorder %s23, 0
      %p155 = por %p153, %p154
      %s157 = sadd.s32 %s156, 1
      %p160 = scmp.eq.s32.totalorder %s17, 1
      %p161 = scmp.ne.s32.totalorder %s156, %s158
      %p162 = scmp.eq.s32.totalorder %s17, 0
      %p163 = por %p161, %p162
      %p164 = scmp.ne.s32.totalorder %s156, %s158
      %p165 = scmp.eq.s32.totalorder %s22, 1
      %p166 = por %p164, %p165
      %p167 = scmp.ne.s32.totalorder %s158, %s159
      %p168 = scmp.eq.s32.totalorder %s22, 0
      %p169 = por %p167, %p168
      %p170 = scmp.ne.s32.totalorder %s158, %s159
      %p171 = scmp.eq.s32.totalorder %s23, 1
      %p172 = por %p170, %p171
      %p174 = scmp.ne.s32.totalorder %s159, %s173
      %p175 = scmp.eq.s32.totalorder %s23, 0
      %p176 = por %p174, %p175
      %s177 = ssub.s32 %s17, %s24
      %p178 = scmp.eq.s32.totalorder %s177, 0
      %s180 = sadd.s32 %s179, 1
      %s181 = scalar_select %p178, %s179, %s180
      %p184 = pneg %p178
      %p185 = scmp.eq.s32.totalorder %s17, 1
      %p186 = por %p184, %p185
      %p187 = scmp.ne.s32.totalorder %s179, %s182
      %p188 = scmp.eq.s32.totalorder %s17, 0
      %p189 = por %p187, %p188
      %p190 = scmp.ne.s32.totalorder %s179, %s182
      %p191 = scmp.eq.s32.totalorder %s22, 1
      %p192 = por %p190, %p191
      %p193 = scmp.ne.s32.totalorder %s182, %s183
      %p194 = scmp.eq.s32.totalorder %s22, 0
      %p195 = por %p193, %p194
      %p196 = scmp.ne.s32.totalorder %s182, %s183
      %p197 = scmp.eq.s32.totalorder %s23, 1
      %p198 = por %p196, %p197
      %p200 = scmp.ne.s32.totalorder %s183, %s199
      %p201 = scmp.eq.s32.totalorder %s23, 0
      %p202 = por %p200, %p201
      %p203 = scmp.le.s32.totalorder 1, %s17
      %p204 = scmp.lt.s32.totalorder %s17, 3
      %p205 = pnand %p203, %p204
      %p206 = pneg %p205
      // Predicated region
      $region9: #{tpu_custom_call.1} parent=5 // pred_check
        _
      $region10: #{tpu_custom_call.1} parent=5 // pred_check_branch
        %208 = sbr.rel (%p205) target = $region12
      $region11: #{tpu_custom_call.1} parent=5 // pred_region
        %s209 = ssub.s32 %s17, 1
        // Predicated region
        $region13: #{tpu_custom_call.1} parent=11 // pred_check
          %p210 = pneg %p64
        $region14: #{tpu_custom_call.1} parent=11 // pred_check_branch
          %212 = sbr.rel (%p210) target = $region16
        $region15: #{tpu_custom_call.1} parent=11 // pred_region
          %s214 = ssub.s32 512, 512
          %215 = vsyncadd [#allocation3], %s214
          %s216 = sshll.u32 [#allocation2], 4
          %s217 = int_to_ptr.vmem [resolvable:$true] %s216
          %222 = dma.hbm_to_vmem [thread:$0]  %s1, 512, %s217, [#allocation3], 128, 128, 8
        $region16: #{tpu_custom_call.1} parent=11 // pred_fallthru
          _
        // Predicated region
        $region17: #{tpu_custom_call.1} parent=11 // pred_check
          %p223 = pneg %p85
        $region18: #{tpu_custom_call.1} parent=11 // pred_check_branch
          %225 = sbr.rel (%p223) target = $region20
        $region19: #{tpu_custom_call.1} parent=11 // pred_region
          _
        $region20: #{tpu_custom_call.1} parent=11 // pred_fallthru
          _
        // Predicated region
        $region21: #{tpu_custom_call.1} parent=11 // pred_check
          %p226 = pneg %p106
        $region22: #{tpu_custom_call.1} parent=11 // pred_check_branch
          %228 = sbr.rel (%p226) target = $region24
        $region23: #{tpu_custom_call.1} parent=11 // pred_region
          _
        $region24: #{tpu_custom_call.1} parent=11 // pred_fallthru
          _
        // Predicated region
        $region25: #{tpu_custom_call.1} parent=11 // pred_check
          %p229 = pneg %p127
        $region26: #{tpu_custom_call.1} parent=11 // pred_check_branch
          %231 = sbr.rel (%p229) target = $region28
        $region27: #{tpu_custom_call.1} parent=11 // pred_region
          _
        $region28: #{tpu_custom_call.1} parent=11 // pred_fallthru
          _
        // Predicated region
        $region29: #{tpu_custom_call.1} parent=11 // pred_check
          %p232 = pneg %p148
        $region30: #{tpu_custom_call.1} parent=11 // pred_check_branch
          %234 = sbr.rel (%p232) target = $region32
        $region31: #{tpu_custom_call.1} parent=11 // pred_region
          _
        $region32: #{tpu_custom_call.1} parent=11 // pred_fallthru
          _
        // Predicated region
        $region33: #{tpu_custom_call.1} parent=11 // pred_check
          %p235 = pneg %p169
        $region34: #{tpu_custom_call.1} parent=11 // pred_check_branch
          %237 = sbr.rel (%p235) target = $region36
        $region35: #{tpu_custom_call.1} parent=11 // pred_region
          _
        $region36: #{tpu_custom_call.1} parent=11 // pred_fallthru
          _
      $region12: #{tpu_custom_call.1} parent=5 // pred_fallthru
        _
      %p238 = scmp.lt.s32.totalorder %s17, 2
      // Predicated region
      $region37: #{tpu_custom_call.1} parent=5 // pred_check
        %p239 = pneg %p238
      $region38: #{tpu_custom_call.1} parent=5 // pred_check_branch
        %241 = sbr.rel (%p239) target = $region40
      $region39: #{tpu_custom_call.1} parent=5 // pred_region
        // Predicated region
        $region41: #{tpu_custom_call.1} parent=39 // pred_check
          %p242 = pneg %p37
        $region42: #{tpu_custom_call.1} parent=39 // pred_check_branch
          %244 = sbr.rel (%p242) target = $region44
        $region43: #{tpu_custom_call.1} parent=39 // pred_region
          %s245 = smul.u32 2, %s17
          %s246 = ssub.s32 3, %s245
          %p247 = scmp.lt.s32.totalorder %s246, 2
          %s248 = scalar_select %p247, %s246, 2
          %s249 = smul.u32 128, %s248
          %p250 = scmp.lt.s32.totalorder %s245, 2
          %s251 = scalar_select %p250, %s245, 2
          %s252 = smul.addr %s251, 8
          %s253 = scalar_lea.vmem %s0, %s252
          %s254 = smul.u32 2, %s17
          %s255 = ssub.s32 3, %s254
          %p256 = scmp.lt.s32.totalorder %s255, 2
          %s257 = scalar_select %p256, %s255, 2
          %s258 = smul.u32 128, %s257
        $region44: #{tpu_custom_call.1} parent=39 // pred_fallthru
          _
      $region40: #{tpu_custom_call.1} parent=5 // pred_fallthru
        _
      %p259 = scmp.le.s32.totalorder 1, %s17
      %p260 = scmp.lt.s32.totalorder %s17, 3
      %p261 = pnand %p259, %p260
      %p262 = pneg %p261
      // Predicated region
      $region45: #{tpu_custom_call.1} parent=5 // pred_check
        _
      $region46: #{tpu_custom_call.1} parent=5 // pred_check_branch
        %264 = sbr.rel (%p261) target = $region48
      $region47: #{tpu_custom_call.1} parent=5 // pred_region
        %s265 = ssub.s32 %s17, 1
        // Predicated region
        $region49: #{tpu_custom_call.1} parent=47 // pred_check
          %p266 = pneg %p64
        $region50: #{tpu_custom_call.1} parent=47 // pred_check_branch
          %268 = sbr.rel (%p266) target = $region52
        $region51: #{tpu_custom_call.1} parent=47 // pred_region
          %269 = dma.done [#allocation3], 512
        $region52: #{tpu_custom_call.1} parent=47 // pred_fallthru
          _
        %s270 = smul.u32 2, %s22
        %s271 = ssub.s32 3, %s270
        %p272 = scmp.lt.s32.totalorder %s271, 2
        %s273 = scalar_select %p272, %s271, 2
        %s274 = smul.u32 128, %s273
        %p275 = scmp.lt.s32.totalorder %s270, 2
        %s276 = scalar_select %p275, %s270, 2
        %s277 = smul.addr %s276, 8
        %s278 = scalar_lea.vmem %s0, %s277
        %p279 = pneg %p43
        %p280 = pneg %p40
        %p281 = pneg %p64
        %p282 = pneg %p61
        %p283 = pneg %p85
        %p284 = pneg %p82
        %p285 = pneg %p106
        %p286 = pneg %p103
        %p287 = pneg %p127
        %p288 = pneg %p124
        %p289 = pneg %p148
        %p290 = pneg %p145
        %p291 = pneg %p169
        %p292 = pneg %p166
        %p293 = pneg %p195
        %p294 = pneg %p192
        %s295 = sand.u32 %s182, 1
        %s296 = scalar_lea.sflag [#allocation4], %s295
        %s297 = sand.u32 %s182, 1
        %s298 = smul.addr %s297, 16
        %s299 = scalar_lea.vmem [#allocation5], %s298
        %s300 = smul.u32 2, %s22
        %s301 = ssub.s32 3, %s300
        %p302 = scmp.lt.s32.totalorder %s301, 2
        %s303 = scalar_select %p302, %s301, 2
        %s304 = smul.u32 128, %s303
        %p305 = scmp.lt.s32.totalorder %s300, 2
        %s306 = scalar_select %p305, %s300, 2
        %s307 = smul.addr %s306, 8
        %s308 = scalar_lea.vmem %s0, %s307
        %s309 = smul.u32 2, %s22
        %s310 = ssub.s32 3, %s309
        %p311 = scmp.lt.s32.totalorder %s310, 2
        %s312 = scalar_select %p311, %s310, 2
        %s313 = smul.u32 128, %s312
        %s314 = smul.u32 2, %s22
        %s315 = ssub.s32 3, %s314
        %p316 = scmp.lt.s32.totalorder %s315, 2
        %s317 = scalar_select %p316, %s315, 2
        %s318 = smul.u32 128, %s317
        %v319 = vld [vmem:[%s308] sm:$0xff]
        %v320 = vld [vmem:[%s308 + $0x8] sm:$0xff]
        %v321 = vlaneseq
        %v322 = vand.u32 %v321, 127
        %vm323 = vcmp.ge.s32.totalorder %v322, 24
        %v324 = vmax.f32 %v319, -1.0
        %v325 = vmax.f32 %v320, -1.0
        %v326 = vmin.f32 %v324, 1.0
        %v327 = vmin.f32 %v325, 1.0
        %v328 = vsel %vm323, %v326, %v319
        %v329 = vsel %vm323, %v327, %v320
        %v330 = vld [vmem:[#allocation2] sm:$0xff]
        %v331 = vld [vmem:[#allocation2 + $0x8] sm:$0xff]
        %v332 = vld [vmem:[#allocation2 + $0x10] sm:$0xff]
        %v333 = vld [vmem:[#allocation2 + $0x18] sm:$0xff]
        %v334 = vld [vmem:[%s4] sm:$0x1]
        %v336 = vlaneseq
        %v337 = vshrl.u32 %v336, 7
        %v338 = vsub.s32 0, %v337
        %v339 = vrot.slane %v334, %v338
        %vm341 = vcmask 261120
        %v343 = vsel %vm341, %v328, 0
        %v346 = vsel %vm341, %v329, 0
        %348 = vmatprep.subr.mxu0 0.0
        %349 = vmatpush1.msra.mxu0 %v330
        %350 = vmatprep.subr.mxu0 0.0
        %351 = vmatpush1.msra.mxu0 %v331
        %352 = vmatprep.subr.mxu0 0.0
        %353 = vmatpush1.msra.mxu0 %v332
        %354 = vmatprep.subr.mxu0 0.0
        %355 = vmatpush1.msra.mxu0 %v333
        %356 = vmatprep.subr.mxu0 0.0
        %357 = vmatpush1.msra.mxu0 0.0
        %358 = vmatprep.subr.mxu0 0.0
        %359 = vmatpush1.msra.mxu0 0.0
        %360 = vmatprep.subr.mxu0 0.0
        %361 = vmatpush1.msra.mxu0 0.0
        %362 = vmatprep.subr.mxu0 0.0
        %363 = vmatpush1.msra.mxu0 0.0
        %364 = vmatprep.subr.mxu0 0.0
        %365 = vmatpush1.msra.mxu0 0.0
        %366 = vmatprep.subr.mxu0 0.0
        %367 = vmatpush1.msra.mxu0 0.0
        %368 = vmatprep.subr.mxu0 0.0
        %369 = vmatpush1.msra.mxu0 0.0
        %370 = vmatprep.subr.mxu0 0.0
        %371 = vmatpush1.msra.mxu0 0.0
        %372 = vmatprep.subr.mxu0 0.0
        %373 = vmatpush1.msra.mxu0 0.0
        %374 = vmatprep.subr.mxu0 0.0
        %375 = vmatpush1.msra.mxu0 0.0
        %376 = vmatprep.subr.mxu0 0.0
        %377 = vmatpush1.msra.mxu0 0.0
        %378 = vmatprep.subr.mxu0 0.0
        %379 = vmatpush1.msra.mxu0 0.0
        %380 = vmatprep.subr.mxu0 0.0
        %381 = vmatpush1.msra.mxu0 0.0
        %382 = vmatprep.subr.mxu0 0.0
        %383 = vmatpush1.msra.mxu0 0.0
        %384 = vmatprep.subr.mxu0 0.0
        %385 = vmatpush1.msra.mxu0 0.0
        %386 = vmatprep.subr.mxu0 0.0
        %387 = vmatpush1.msra.mxu0 0.0
        %388 = vmatprep.subr.mxu0 0.0
        %389 = vmatpush1.msra.mxu0 0.0
        %390 = vmatprep.subr.mxu0 0.0
        %391 = vmatpush1.msra.mxu0 0.0
        %392 = vmatprep.subr.mxu0 0.0
        %393 = vmatpush1.msra.mxu0 0.0
        %394 = vmatprep.subr.mxu0 0.0
        %395 = vmatpush1.msra.mxu0 0.0
        %396 = vmatprep.subr.mxu0 0.0
        %397 = vmatpush1.msra.mxu0 0.0
        %398 = vmatprep.subr.mxu0 0.0
        %399 = vmatpush1.msra.mxu0 0.0
        %400 = vmatprep.subr.mxu0 0.0
        %401 = vmatpush1.msra.mxu0 0.0
        %402 = vmatprep.subr.mxu0 0.0
        %403 = vmatpush1.msra.mxu0 0.0
        %404 = vmatprep.subr.mxu0 0.0
        %405 = vmatpush1.msra.mxu0 0.0
        %406 = vmatprep.subr.mxu0 0.0
        %407 = vmatpush1.msra.mxu0 0.0
        %408 = vmatprep.subr.mxu0 0.0
        %409 = vmatpush1.msra.mxu0 0.0
        %410 = vmatprep.subr.mxu0 0.0
        %411 = vmatpush1.msra.mxu0 0.0
        %412 = vmatprep.mubr.f32.mxu0 0.0
        %413 = vmatmul.mubr.f32.gmra.mrb[0].mxu0 %v343
        %v414 = vpop.f32.mrb[0].mxu0
        %v415 = vadd.f32 %v339, %v414
        %v416 = vpop.f32.mrb[0].mxu0
        %417 = vmatprep.mubr.f32.mxu0 0.0
        %418 = vmatmul.mubr.f32.gmra.mrb[0].mxu0 %v346
        %v419 = vpop.f32.mrb[0].mxu0
        %v420 = vadd.f32 %v339, %v419
        %v421 = vpop.f32.mrb[0].mxu0
        %422 = vdwg.mxu0
        %v423 = vmax.f32 %v415, 0.0
        %v424 = vmax.f32 %v420, 0.0
        %v425 = vld [vmem:[%s2] sm:$0xff]
        %v426 = vld [vmem:[%s2 + $0x8] sm:$0xff]
        %v427 = vld [vmem:[%s2 + $0x10] sm:$0xff]
        %v428 = vld [vmem:[%s2 + $0x18] sm:$0xff]
        %v429 = vld [vmem:[%s2 + $0x20] sm:$0xff]
        %v430 = vld [vmem:[%s2 + $0x28] sm:$0xff]
        %v431 = vld [vmem:[%s2 + $0x30] sm:$0xff]
        %v432 = vld [vmem:[%s2 + $0x38] sm:$0xff]
        %v433 = vld [vmem:[%s5] sm:$0x1]
        %v435 = vlaneseq
        %v436 = vshrl.u32 %v435, 7
        %v437 = vsub.s32 0, %v436
        %v438 = vrot.slane %v433, %v437
        %vm440 = vcmask 523264
        %v442 = vsel %vm440, %v423, 0
        %v445 = vsel %vm440, %v424, 0
        %447 = vmatprep.subr.mxu0 0.0
        %448 = vmatpush1.msra.mxu0 %v425
        %449 = vmatprep.subr.mxu0 0.0
        %450 = vmatpush1.msra.mxu0 %v426
        %451 = vmatprep.subr.mxu0 0.0
        %452 = vmatpush1.msra.mxu0 %v427
        %453 = vmatprep.subr.mxu0 0.0
        %454 = vmatpush1.msra.mxu0 %v428
        %455 = vmatprep.subr.mxu0 0.0
        %456 = vmatpush1.msra.mxu0 %v429
        %457 = vmatprep.subr.mxu0 0.0
        %458 = vmatpush1.msra.mxu0 %v430
        %459 = vmatprep.subr.mxu0 0.0
        %460 = vmatpush1.msra.mxu0 %v431
        %461 = vmatprep.subr.mxu0 0.0
        %462 = vmatpush1.msra.mxu0 %v432
        %463 = vmatprep.subr.mxu0 0.0
        %464 = vmatpush1.msra.mxu0 0.0
        %465 = vmatprep.subr.mxu0 0.0
        %466 = vmatpush1.msra.mxu0 0.0
        %467 = vmatprep.subr.mxu0 0.0
        %468 = vmatpush1.msra.mxu0 0.0
        %469 = vmatprep.subr.mxu0 0.0
        %470 = vmatpush1.msra.mxu0 0.0
        %471 = vmatprep.subr.mxu0 0.0
        %472 = vmatpush1.msra.mxu0 0.0
        %473 = vmatprep.subr.mxu0 0.0
        %474 = vmatpush1.msra.mxu0 0.0
        %475 = vmatprep.subr.mxu0 0.0
        %476 = vmatpush1.msra.mxu0 0.0
        %477 = vmatprep.subr.mxu0 0.0
        %478 = vmatpush1.msra.mxu0 0.0
        %479 = vmatprep.subr.mxu0 0.0
        %480 = vmatpush1.msra.mxu0 0.0
        %481 = vmatprep.subr.mxu0 0.0
        %482 = vmatpush1.msra.mxu0 0.0
        %483 = vmatprep.subr.mxu0 0.0
        %484 = vmatpush1.msra.mxu0 0.0
        %485 = vmatprep.subr.mxu0 0.0
        %486 = vmatpush1.msra.mxu0 0.0
        %487 = vmatprep.subr.mxu0 0.0
        %488 = vmatpush1.msra.mxu0 0.0
        %489 = vmatprep.subr.mxu0 0.0
        %490 = vmatpush1.msra.mxu0 0.0
        %491 = vmatprep.subr.mxu0 0.0
        %492 = vmatpush1.msra.mxu0 0.0
        %493 = vmatprep.subr.mxu0 0.0
        %494 = vmatpush1.msra.mxu0 0.0
        %495 = vmatprep.subr.mxu0 0.0
        %496 = vmatpush1.msra.mxu0 0.0
        %497 = vmatprep.subr.mxu0 0.0
        %498 = vmatpush1.msra.mxu0 0.0
        %499 = vmatprep.subr.mxu0 0.0
        %500 = vmatpush1.msra.mxu0 0.0
        %501 = vmatprep.subr.mxu0 0.0
        %502 = vmatpush1.msra.mxu0 0.0
        %503 = vmatprep.subr.mxu0 0.0
        %504 = vmatpush1.msra.mxu0 0.0
        %505 = vmatprep.subr.mxu0 0.0
        %506 = vmatpush1.msra.mxu0 0.0
        %507 = vmatprep.subr.mxu0 0.0
        %508 = vmatpush1.msra.mxu0 0.0
        %509 = vmatprep.subr.mxu0 0.0
        %510 = vmatpush1.msra.mxu0 0.0
        %511 = vmatprep.mubr.f32.mxu0 0.0
        %512 = vmatmul.mubr.f32.gmra.mrb[0].mxu0 %v442
        %v513 = vpop.f32.mrb[0].mxu0
        %v514 = vadd.f32 %v438, %v513
        %v515 = vpop.f32.mrb[0].mxu0
        %516 = vmatprep.mubr.f32.mxu0 0.0
        %517 = vmatmul.mubr.f32.gmra.mrb[0].mxu0 %v445
        %v518 = vpop.f32.mrb[0].mxu0
        %v519 = vadd.f32 %v438, %v518
        %v520 = vpop.f32.mrb[0].mxu0
        %521 = vdwg.mxu0
        %v522 = vmax.f32 %v514, 0.0
        %v523 = vmax.f32 %v519, 0.0
        %v524 = vld [vmem:[%s3] sm:$0xff]
        %v525 = vld [vmem:[%s3 + $0x8] sm:$0xff]
        %v526 = vld [vmem:[%s3 + $0x10] sm:$0xff]
        %v527 = vld [vmem:[%s3 + $0x18] sm:$0xff]
        %v528 = vld [vmem:[%s3 + $0x20] sm:$0xff]
        %v529 = vld [vmem:[%s3 + $0x28] sm:$0xff]
        %v530 = vld [vmem:[%s3 + $0x30] sm:$0xff]
        %v531 = vld [vmem:[%s3 + $0x38] sm:$0xff]
        %v532 = vld [vmem:[%s6] sm:$0x1]
        %v534 = vlaneseq
        %v535 = vshrl.u32 %v534, 7
        %v536 = vsub.s32 0, %v535
        %v537 = vrot.slane %v532, %v536
        %v540 = vsel %vm440, %v522, 0
        %v543 = vsel %vm440, %v523, 0
        %545 = vmatprep.subr.mxu0 0.0
        %546 = vmatpush1.msra.mxu0 %v524
        %547 = vmatprep.subr.mxu0 0.0
        %548 = vmatpush1.msra.mxu0 %v525
        %549 = vmatprep.subr.mxu0 0.0
        %550 = vmatpush1.msra.mxu0 %v526
        %551 = vmatprep.subr.mxu0 0.0
        %552 = vmatpush1.msra.mxu0 %v527
        %553 = vmatprep.subr.mxu0 0.0
        %554 = vmatpush1.msra.mxu0 %v528
        %555 = vmatprep.subr.mxu0 0.0
        %556 = vmatpush1.msra.mxu0 %v529
        %557 = vmatprep.subr.mxu0 0.0
        %558 = vmatpush1.msra.mxu0 %v530
        %559 = vmatprep.subr.mxu0 0.0
        %560 = vmatpush1.msra.mxu0 %v531
        %561 = vmatprep.subr.mxu0 0.0
        %562 = vmatpush1.msra.mxu0 0.0
        %563 = vmatprep.subr.mxu0 0.0
        %564 = vmatpush1.msra.mxu0 0.0
        %565 = vmatprep.subr.mxu0 0.0
        %566 = vmatpush1.msra.mxu0 0.0
        %567 = vmatprep.subr.mxu0 0.0
        %568 = vmatpush1.msra.mxu0 0.0
        %569 = vmatprep.subr.mxu0 0.0
        %570 = vmatpush1.msra.mxu0 0.0
        %571 = vmatprep.subr.mxu0 0.0
        %572 = vmatpush1.msra.mxu0 0.0
        %573 = vmatprep.subr.mxu0 0.0
        %574 = vmatpush1.msra.mxu0 0.0
        %575 = vmatprep.subr.mxu0 0.0
        %576 = vmatpush1.msra.mxu0 0.0
        %577 = vmatprep.subr.mxu0 0.0
        %578 = vmatpush1.msra.mxu0 0.0
        %579 = vmatprep.subr.mxu0 0.0
        %580 = vmatpush1.msra.mxu0 0.0
        %581 = vmatprep.subr.mxu0 0.0
        %582 = vmatpush1.msra.mxu0 0.0
        %583 = vmatprep.subr.mxu0 0.0
        %584 = vmatpush1.msra.mxu0 0.0
        %585 = vmatprep.subr.mxu0 0.0
        %586 = vmatpush1.msra.mxu0 0.0
        %587 = vmatprep.subr.mxu0 0.0
        %588 = vmatpush1.msra.mxu0 0.0
        %589 = vmatprep.subr.mxu0 0.0
        %590 = vmatpush1.msra.mxu0 0.0
        %591 = vmatprep.subr.mxu0 0.0
        %592 = vmatpush1.msra.mxu0 0.0
        %593 = vmatprep.subr.mxu0 0.0
        %594 = vmatpush1.msra.mxu0 0.0
        %595 = vmatprep.subr.mxu0 0.0
        %596 = vmatpush1.msra.mxu0 0.0
        %597 = vmatprep.subr.mxu0 0.0
        %598 = vmatpush1.msra.mxu0 0.0
        %599 = vmatprep.subr.mxu0 0.0
        %600 = vmatpush1.msra.mxu0 0.0
        %601 = vmatprep.subr.mxu0 0.0
        %602 = vmatpush1.msra.mxu0 0.0
        %603 = vmatprep.subr.mxu0 0.0
        %604 = vmatpush1.msra.mxu0 0.0
        %605 = vmatprep.subr.mxu0 0.0
        %606 = vmatpush1.msra.mxu0 0.0
        %607 = vmatprep.subr.mxu0 0.0
        %608 = vmatpush1.msra.mxu0 0.0
        %609 = vmatprep.mubr.f32.mxu0 0.0
        %610 = vmatmul.mubr.f32.gmra.mrb[0].mxu0 %v540
        %v611 = vpop.f32.mrb[0].mxu0
        %v612 = vadd.f32 %v537, %v611
        %v613 = vpop.f32.mrb[0].mxu0
        %614 = vmatprep.mubr.f32.mxu0 0.0
        %615 = vmatmul.mubr.f32.gmra.mrb[0].mxu0 %v543
        %v616 = vpop.f32.mrb[0].mxu0
        %v617 = vadd.f32 %v537, %v616
        %v618 = vpop.f32.mrb[0].mxu0
        %619 = vdwg.mxu0
        %vm620 = vcmask 195584
        %621 = vst.msk [vmem:[%s299] sm:$0xff] %vm620, %v612
        %622 = vst.msk [vmem:[%s299 + $0x8] sm:$0xff] %vm620, %v617
        %s623 = sand.u32 %s182, 1
        %s624 = scalar_lea.sflag [#allocation4], %s623
        %s625 = sand.u32 %s182, 1
        %s626 = smul.addr %s625, 16
        %s627 = scalar_lea.vmem [#allocation5], %s626
        // Predicated region
        $region53: #{tpu_custom_call.1} parent=47 // pred_check
          %p628 = pneg %p192
        $region54: #{tpu_custom_call.1} parent=47 // pred_check_branch
          %630 = sbr.rel (%p628) target = $region56
        $region55: #{tpu_custom_call.1} parent=47 // pred_region
          %s631 = smul.u32 2, %s22
          %s632 = ssub.s32 3, %s631
          %p633 = scmp.lt.s32.totalorder %s632, 2
          %s634 = scalar_select %p633, %s632, 2
          %s635 = smul.u32 128, %s634
          %s637 = ssub.s32 256, %s635
          %638 = vsyncadd %s624, %s637
          %p639 = scmp.ne.s32.totalorder 0, %s635
          %s640 = smul.addr %s631, 128
          %s641 = scalar_lea.hbm %s7, %s640
          %s642 = smul.u32 8, %s634
          %s643 = sshll.u32 %s627, 4
          %s644 = int_to_ptr.vmem [resolvable:$true] %s643
          %s645 = sshll.u32 %s642, 4
          %649 = dma.vmem_to_hbm [thread:$0]  (%p639), %s644, %s645, %s641, %s624, 128, 128, 8
        $region56: #{tpu_custom_call.1} parent=47 // pred_fallthru
          _
      $region48: #{tpu_custom_call.1} parent=5 // pred_fallthru
        _
      %p650 = scmp.le.s32.totalorder 2, %s17
      // Predicated region
      $region57: #{tpu_custom_call.1} parent=5 // pred_check
        %p651 = pneg %p650
      $region58: #{tpu_custom_call.1} parent=5 // pred_check_branch
        %653 = sbr.rel (%p651) target = $region60
      $region59: #{tpu_custom_call.1} parent=5 // pred_region
        %s654 = ssub.s32 %s17, 2
        // Predicated region
        $region61: #{tpu_custom_call.1} parent=59 // pred_check
          %p655 = pneg %p198
        $region62: #{tpu_custom_call.1} parent=59 // pred_check_branch
          %657 = sbr.rel (%p655) target = $region64
        $region63: #{tpu_custom_call.1} parent=59 // pred_region
          %s658 = sand.u32 %s183, 1
          %s659 = scalar_lea.sflag [#allocation4], %s658
          %s660 = sand.u32 %s183, 1
          %s661 = smul.addr %s660, 16
          %s662 = scalar_lea.vmem [#allocation5], %s661
          %663 = dma.done %s659, 256
        $region64: #{tpu_custom_call.1} parent=59 // pred_fallthru
          _
      $region60: #{tpu_custom_call.1} parent=5 // pred_fallthru
        _
    $region6: #{tpu_custom_call.1} parent=1 // loop_footer
      %s21 = sadd.s32 1, %s17
    $region7: #{tpu_custom_call.1} parent=1 // loop_footer_branch
      %16 = sbr.rel target = $region3
    $region8: #{tpu_custom_call.1} parent=1 // loop_exit
      _
    %664 = vsyncpa [#allocation3], 1
    %s665 = scalar_lea.sflag [#allocation3], 1
    %666 = vsyncpa %s665, 1
    %667 = vsyncpa [#allocation4], 1
    %s668 = scalar_lea.sflag [#allocation4], 1
    %669 = vsyncpa %s668, 1

</llo_original>
